<compile_context>
chip_gen: v7x
topology: tpu7x:2x2x1
jax: 0.10.0
libtpu: 0.0.40
codegen_flags: <defaults>
</compile_context>

<pallas_src>
import jax
import jax.numpy as jnp
from jax.experimental import pallas as pl
from jax.experimental.pallas import tpu as pltpu


def _patch_embed_kernel(x_ref, w_ref, b_ref, o_ref):
    # x_ref: (tl, P)  patches of the flattened signal for batch b
    # w_ref: (P, E)   weight slab of output-lead c (columns permuted host-side)
    # b_ref: (1, E)   bias slice of output-lead c
    # o_ref: (tl, E)  tile written directly at out4d[b, c, l0:l0+tl, :]
    acc = jnp.dot(x_ref[...], w_ref[...], preferred_element_type=jnp.float32)
    o_ref[...] = (acc + b_ref[...]).astype(o_ref.dtype)


def _tpu_vmem_capacity_bytes():
    """Per-core VMEM capacity (generation-aware); conservative fallback if unavailable."""
    try:
        cap = getattr(pltpu.get_tpu_info(), "vmem_capacity_bytes", None)
        if cap:
            return int(cap)
    except Exception:
        pass
    return 64 << 20  # v7x-sized per-TC VMEM; safe lower bound for v5e/v6e as well


def _pick_tile_l(L, embed_dim, out_itemsize, budget_bytes):
    """Largest L-tile whose double-buffered working set (output tile + 128-lane-padded
    f32 x tile) fits `budget_bytes`.  tl is a multiple of 16 so a bf16 output tile keeps
    native (16,128) packing; we prefer a tl that divides L (no ragged masked trailing
    block) and cap at 4096 rows."""
    bytes_per_row = 2 * (embed_dim * out_itemsize + 128 * 4)
    cap = min(int(budget_bytes // bytes_per_row), 4096)
    if L <= cap:
        return L
    t = (cap // 16) * 16
    while t >= 16:
        if L % t == 0:
            return t
        t -= 16
    return max(16, (cap // 16) * 16)


def patch_independent_embed(x, weight, bias, *, patch_size, in_chans, embed_dim,
                            out_dtype=jnp.bfloat16):
    """x: (B, C, W) f32; weight: (in_chans*embed_dim, 1, patch_size); bias: (in_chans*embed_dim,).

    Default out_dtype is bfloat16 (the kernel is output-write bound, so this halves HBM
    traffic).  Pass out_dtype=jnp.float32 for exact torch-dtype parity.
    """
    B, C, W = x.shape
    total = C * W
    assert total % patch_size == 0, "flattened signal must be divisible by patch_size"
    L = total // patch_size                    # conv output length
    num_patches = in_chans * L
    C_out = in_chans * embed_dim
    assert weight.shape == (C_out, 1, patch_size)
    assert bias.shape == (C_out,)

    out_itemsize = jnp.dtype(out_dtype).itemsize

    # Patches of the flattened signal (matches torch .reshape(B, 1, C*W) + stride-P windows).
    patches = x.reshape(B, L, patch_size)                                     # (B, L, P)

    # Conv channel o = e*in_chans + c.  Reorder so each output lead c owns a contiguous
    # (P, E) weight slab -> kernel tiles land directly in the final layout.
    w3 = weight.reshape(embed_dim, in_chans, patch_size).transpose(1, 2, 0)   # (in_chans, P, E)
    b3 = bias.reshape(embed_dim, in_chans).T.reshape(in_chans, 1, embed_dim)  # (in_chans, 1, E)

    vmem_cap = _tpu_vmem_capacity_bytes()
    budget = min(40 << 20, vmem_cap // 2)      # ~32 MiB on v7x, ~40 MiB on v5e/v6e
    tl = _pick_tile_l(L, embed_dim, out_itemsize, budget)
    l_blocks = pl.cdiv(L, tl)

    # Actual double-buffered working set + weight/bias buffers + internal-scratch headroom.
    work = 2 * tl * (embed_dim * out_itemsize + 128 * 4)
    work += 2 * 4 * (patch_size * embed_dim + 8 * embed_dim)
    vmem_limit = int(min(max(work + (6 << 20), 32 << 20), (vmem_cap * 3) // 4))

    flops = 2 * B * in_chans * L * patch_size * embed_dim
    bytes_accessed = (B * L * patch_size * 4
                      + in_chans * patch_size * embed_dim * 4
                      + in_chans * embed_dim * 4
                      + B * in_chans * L * embed_dim * out_itemsize)
    cost = pl.CostEstimate(flops=flops, transcendentals=0, bytes_accessed=bytes_accessed)

    # Lead axis innermost: the (tl, P) x tile stays resident across all in_chans steps,
    # only the small (P, E) weight slab + bias change per step.
    grid = (B, l_blocks, in_chans)

    out4d = pl.pallas_call(
        _patch_embed_kernel,
        out_shape=jax.ShapeDtypeStruct((B, in_chans, L, embed_dim), out_dtype),
        grid_spec=pltpu.PrefetchScalarGridSpec(
            num_scalar_prefetch=0,
            grid=grid,
            in_specs=[
                pl.BlockSpec((None, tl, patch_size), lambda b, i, c: (b, i, 0)),
                pl.BlockSpec((None, patch_size, embed_dim), lambda b, i, c: (c, 0, 0)),
                pl.BlockSpec((None, 1, embed_dim), lambda b, i, c: (c, 0, 0)),
            ],
            out_specs=pl.BlockSpec(
                (None, None, tl, embed_dim), lambda b, i, c: (b, c, i, 0)),
        ),
        compiler_params=pltpu.CompilerParams(
            dimension_semantics=("parallel", "parallel", "parallel"),
            vmem_limit_bytes=vmem_limit),
        cost_estimate=cost,
    )(patches, w3, b3)

    # out4d[b, c, l, e] == y[b, c*L + l, e]  ->  final reshape is a free contiguous view.
    return out4d.reshape(B, num_patches, embed_dim)


def _torch_reference(x, weight, bias, *, patch_size, in_chans, embed_dim):
    """Faithful JAX translation of the PyTorch forward (verification only)."""
    B, C, W = x.shape
    xf = x.reshape(B, 1, C * W)
    conv = jax.lax.conv_general_dilated(
        xf, weight, window_strides=(patch_size,), padding="VALID",
        dimension_numbers=("NCH", "OIH", "NCH"))
    conv = conv + bias[None, :, None]
    num_patches = in_chans * ((C * W) // patch_size)
    return conv.reshape(B, embed_dim, num_patches).transpose(0, 2, 1)


if __name__ == "__main__":
    # Small self-consistent config: signal_size = in_chans * W_per_lead so the module's
    # reshape is valid (C*W == signal_size).
    B, in_chans, patch_size, embed_dim = 2, 4, 16, 32
    W_per_lead = 64
    signal_size = in_chans * W_per_lead                     # 256, divisible by patch_size
    num_patches = in_chans * (signal_size // patch_size)    # 64
    C_out = in_chans * embed_dim                            # 128

    key = jax.random.PRNGKey(0)
    k_w, k_b, k_x = jax.random.split(key, 3)
    # nn.init.trunc_normal_(std=0.02) equivalent deterministic init.
    weight = 0.02 * jax.random.truncated_normal(
        k_w, -2.0, 2.0, (C_out, 1, patch_size), jnp.float32)
    bias = 0.01 * jax.random.normal(k_b, (C_out,), jnp.float32)
    x = jax.random.normal(k_x, (B, in_chans, W_per_lead), jnp.float32)

    y_ref = _torch_reference(
        x, weight, bias,
        patch_size=patch_size, in_chans=in_chans, embed_dim=embed_dim)

    # Exact-parity path (f32 output, same dtype as the torch module).
    y_f32 = patch_independent_embed(
        x, weight, bias,
        patch_size=patch_size, in_chans=in_chans, embed_dim=embed_dim,
        out_dtype=jnp.float32)
    y_f32 = jax.block_until_ready(y_f32)
    assert y_f32.shape == (B, num_patches, embed_dim), y_f32.shape
    assert jnp.allclose(y_f32, y_ref, atol=1e-5, rtol=1e-5), "f32 mismatch vs reference"

    # Default fast path (bf16 output: halves the dominant HBM write traffic).
    y_bf16 = patch_independent_embed(
        x, weight, bias,
        patch_size=patch_size, in_chans=in_chans, embed_dim=embed_dim)
    y_bf16 = jax.block_until_ready(y_bf16)
    assert y_bf16.shape == (B, num_patches, embed_dim), y_bf16.shape
    assert y_bf16.dtype == jnp.bfloat16
    assert jnp.allclose(y_bf16.astype(jnp.float32), y_ref, atol=3e-2, rtol=3e-2), \
        "bf16 mismatch vs reference"

    print("KERNEL_OK")
</pallas_src>

<mosaic_0001>
module attributes {stable_mosaic.version = 11 : i64} {
  func.func @_patch_embed_kernel(%arg0: i32, %arg1: i32, %arg2: i32, %arg3: memref<1x16x16xf32, #tpu.memory_space<vmem>>, %arg4: memref<1x16x32xf32, #tpu.memory_space<vmem>>, %arg5: memref<1x1x32xf32, #tpu.memory_space<vmem>>, %arg6: memref<1x1x16x32xf32, #tpu.memory_space<vmem>>) attributes {dimension_semantics = [#tpu.dimension_semantics<parallel>, #tpu.dimension_semantics<parallel>, #tpu.dimension_semantics<parallel>], iteration_bounds = array<i64: 2, 1, 4>, scalar_prefetch = 0 : i64, scratch_operands = 0 : i64, tpu.core_type = #tpu.core_type<tc>, window_params = [{transform_indices = @transform_0, window_bounds = array<i64: 1, 16, 16>}, {transform_indices = @transform_1, window_bounds = array<i64: 1, 16, 32>}, {transform_indices = @transform_2, window_bounds = array<i64: 1, 1, 32>}, {transform_indices = @transform_3, window_bounds = array<i64: 1, 1, 16, 32>}]} {
    %c0 = arith.constant 0 : index
    %c0_0 = arith.constant 0 : index
    %c0_1 = arith.constant 0 : index
    %0 = vector.load %arg3[%c0, %c0_0, %c0_1] : memref<1x16x16xf32, #tpu.memory_space<vmem>>, vector<1x16x16xf32>
    %1 = vector.shape_cast %0 : vector<1x16x16xf32> to vector<16x16xf32>
    %c0_2 = arith.constant 0 : index
    %c0_3 = arith.constant 0 : index
    %c0_4 = arith.constant 0 : index
    %2 = vector.load %arg4[%c0_2, %c0_3, %c0_4] : memref<1x16x32xf32, #tpu.memory_space<vmem>>, vector<1x16x32xf32>
    %3 = vector.shape_cast %2 : vector<1x16x32xf32> to vector<16x32xf32>
    %cst = arith.constant dense<0.000000e+00> : vector<16x32xf32>
    %4 = tpu.matmul %1, %3, %cst {dimension_numbers = #tpu.dot_dimension_numbers<[1], [0], [0], [1], [0, 0, 1, 1], [], []>} : vector<16x16xf32>, vector<16x32xf32>, vector<16x32xf32> -> vector<16x32xf32>
    %c0_5 = arith.constant 0 : index
    %c0_6 = arith.constant 0 : index
    %c0_7 = arith.constant 0 : index
    %5 = vector.load %arg5[%c0_5, %c0_6, %c0_7] : memref<1x1x32xf32, #tpu.memory_space<vmem>>, vector<1x1x32xf32>
    %6 = vector.shape_cast %5 : vector<1x1x32xf32> to vector<1x32xf32>
    %7 = vector.broadcast %6 : vector<1x32xf32> to vector<16x32xf32>
    %8 = arith.addf %4, %7 : vector<16x32xf32>
    %c0_8 = arith.constant 0 : index
    %c0_9 = arith.constant 0 : index
    %c0_10 = arith.constant 0 : index
    %c0_11 = arith.constant 0 : index
    %9 = vector.load %arg6[%c0_8, %c0_9, %c0_10, %c0_11] : memref<1x1x16x32xf32, #tpu.memory_space<vmem>>, vector<1x1x16x32xf32>
    %10 = vector.shape_cast %9 : vector<1x1x16x32xf32> to vector<16x32xf32>
    %11 = vector.shape_cast %8 : vector<16x32xf32> to vector<1x1x16x32xf32>
    tpu.vector_store %arg6[%c0_8, %c0_9, %c0_10, %c0_11], %11 {strides = array<i32>} : memref<1x1x16x32xf32, #tpu.memory_space<vmem>>, vector<1x1x16x32xf32>,
    return
  }
  func.func @transform_0(%arg0: i32, %arg1: i32, %arg2: i32) -> (i32, i32, i32) {
    %c0_i32 = arith.constant 0 : i32
    %c0_i32_0 = arith.constant 0 : i32
    return %arg0, %arg1, %c0_i32 : i32, i32, i32
  }
  func.func @transform_1(%arg0: i32, %arg1: i32, %arg2: i32) -> (i32, i32, i32) {
    %c0_i32 = arith.constant 0 : i32
    %c0_i32_0 = arith.constant 0 : i32
    %c0_i32_1 = arith.constant 0 : i32
    return %arg2, %c0_i32, %c0_i32_0 : i32, i32, i32
  }
  func.func @transform_2(%arg0: i32, %arg1: i32, %arg2: i32) -> (i32, i32, i32) {
    %c0_i32 = arith.constant 0 : i32
    %c0_i32_0 = arith.constant 0 : i32
    %c0_i32_1 = arith.constant 0 : i32
    return %arg2, %c0_i32, %c0_i32_0 : i32, i32, i32
  }
  func.func @transform_3(%arg0: i32, %arg1: i32, %arg2: i32) -> (i32, i32, i32, i32) {
    %c0_i32 = arith.constant 0 : i32
    %c0_i32_0 = arith.constant 0 : i32
    return %arg0, %arg2, %arg1, %c0_i32 : i32, i32, i32, i32
  }
}

</mosaic_0001>

<llo_original>
// kernel: tpu_custom_call.1
$region0: #{tpu_custom_call.1}
  #allocation0 [shape = 'u32[]', space=smem, size = 0x4, offset = 0x4, fixed_abs, tag = 'smem constant byte address 0x4 - core index']
  #allocation1 [shape = 'u32[144,128]{1,0:T(1,128)}', space=vmem, size = 0x12000, scoped, tag = 'internal scratch']
  %s0 = inlined_call_operand.hbm [shape: f32[2,16,16], index: 0, kind: input, shape index: {}]
  %s1 = inlined_call_operand.hbm [shape: f32[4,16,32], index: 1, kind: input, shape index: {}]
  %s2 = inlined_call_operand.vmem [shape: f32[4,1,32], index: 2, kind: input, shape index: {}]
  %s3 = inlined_call_operand.hbm [shape: f32[2,4,16,32], index: 3, kind: output, shape index: {}]
  %s4 = sld [smem:[#allocation0]]
  $region53: #{tpu_custom_call.1} parent=0
    _
  %s6 = ssub.s32 1, %s4
  %s7 = scalar_select 0, %s6, %s4
  $region1: #{tpu_custom_call.1} parent=0
    #allocation2 [shape = 'u8[16384]{0}', space=vmem, size = 0x4000, scoped, tag = 'input window, operand 0']
    #allocation3 [shape = 's32[2]{0}', space=sflag, size = 0x8, scoped, tag = 'scoped memory for tpu_custom_call.1']
    #allocation4 [shape = 's32[2]{0}', space=sflag, size = 0x8, scoped, tag = 'scoped memory for tpu_custom_call.1']
    #allocation5 [shape = 'u8[16384]{0}', space=vmem, size = 0x4000, scoped, tag = 'input window, operand 1']
    #allocation6 [shape = 's32[2]{0}', space=sflag, size = 0x8, scoped, tag = 'scoped memory for tpu_custom_call.1']
    #allocation7 [shape = 'u8[16384]{0}', space=vmem, size = 0x4000, scoped, tag = 'output window, operand 0']
    %8 = vsyncpa [#allocation3], 0
    %s9 = scalar_lea.sflag [#allocation3], 1
    %10 = vsyncpa %s9, 0
    %11 = vsyncpa [#allocation6], 0
    %s12 = scalar_lea.sflag [#allocation6], 1
    %13 = vsyncpa %s12, 0
    %14 = vsyncpa [#allocation4], 0
    %s15 = scalar_lea.sflag [#allocation4], 1
    %16 = vsyncpa %s15, 0
    loop: start=0, step=1, limit=10
    $region2: #{tpu_custom_call.1} parent=1 // loop_pre_header
      _
    $region3: #{tpu_custom_call.1} parent=1 // loop_header
      %s18 = sphi 0, %s22
      %p19 = scmp.ge.s32.totalorder %s18, 10
      %s25 = sphi 0, %s44
      %s26 = sphi 0, %s40
      %s27 = sphi 0, %s36
      %s28 = sphi 0, %s25
      %s29 = sphi 0, %s26
      %s30 = sphi 0, %s27
      %s31 = sphi 0, %s28
      %s32 = sphi 0, %s29
      %s33 = sphi 0, %s30
      %s49 = sphi 0, %s51
      %s52 = sphi 0, %s49
      %s53 = sphi 0, %s52
      %s69 = sphi 0, %s53
      %s75 = sphi 0, %s77
      %s78 = sphi 0, %s75
      %s79 = sphi 0, %s78
      %s95 = sphi 0, %s79
      %s101 = sphi 0, %s103
      %s104 = sphi 0, %s101
      %s105 = sphi 0, %s104
      %s121 = sphi 0, %s105
      %s131 = sphi 0, %s133
      %s134 = sphi 0, %s131
      %s135 = sphi 0, %s134
      %s151 = sphi 0, %s135
    $region4: #{tpu_custom_call.1} parent=1 // loop_header_branch
      %21 = sbr.rel (%p19) target = $region8
    $region5: #{tpu_custom_call.1} parent=1 // loop_body
      %s23 = ssub.s32 %s18, 1
      %s24 = ssub.s32 %s18, 2
      %s34 = sadd.s32 1, %s27
      %p35 = scmp.ge.s32.totalorder %s34, 4
      %s36 = scalar_select %p35, 0, %s34
      %s37 = sadd.s32 1, %s26
      %s38 = scalar_select %p35, %s37, %s26
      %p39 = scmp.ge.s32.totalorder %s38, 1
      %s40 = scalar_select %p39, 0, %s38
      %s41 = sadd.s32 1, %s25
      %s42 = scalar_select %p39, %s41, %s25
      %p43 = scmp.ge.s32.totalorder %s42, 2
      %s44 = scalar_select %p43, 0, %s42
      %s45 = ssub.s32 %s25, %s44
      %s46 = ssub.s32 %s26, %s40
      %s47 = sor.u32 %s45, %s46
      %p48 = scmp.eq.s32.totalorder %s47, 0
      %s50 = sadd.s32 %s49, 1
      %s51 = scalar_select %p48, %s49, %s50
      %p54 = pneg %p48
      %p55 = scmp.eq.s32.totalorder %s18, 7
      %p56 = por %p54, %p55
      %p57 = scmp.ne.s32.totalorder %s49, %s52
      %p58 = scmp.eq.s32.totalorder %s18, 0
      %p59 = por %p57, %p58
      %p60 = scmp.ne.s32.totalorder %s49, %s52
      %p61 = scmp.eq.s32.totalorder %s23, 7
      %p62 = por %p60, %p61
      %p63 = scmp.ne.s32.totalorder %s52, %s53
      %p64 = scmp.eq.s32.totalorder %s23, 0
      %p65 = por %p63, %p64
      %p66 = scmp.ne.s32.totalorder %s52, %s53
      %p67 = scmp.eq.s32.totalorder %s24, 7
      %p68 = por %p66, %p67
      %p70 = scmp.ne.s32.totalorder %s53, %s69
      %p71 = scmp.eq.s32.totalorder %s24, 0
      %p72 = por %p70, %p71
      %s73 = ssub.s32 %s27, %s36
      %p74 = scmp.eq.s32.totalorder %s73, 0
      %s76 = sadd.s32 %s75, 1
      %s77 = scalar_select %p74, %s75, %s76
      %p80 = pneg %p74
      %p81 = scmp.eq.s32.totalorder %s18, 7
      %p82 = por %p80, %p81
      %p83 = scmp.ne.s32.totalorder %s75, %s78
      %p84 = scmp.eq.s32.totalorder %s18, 0
      %p85 = por %p83, %p84
      %p86 = scmp.ne.s32.totalorder %s75, %s78
      %p87 = scmp.eq.s32.totalorder %s23, 7
      %p88 = por %p86, %p87
      %p89 = scmp.ne.s32.totalorder %s78, %s79
      %p90 = scmp.eq.s32.totalorder %s23, 0
      %p91 = por %p89, %p90
      %p92 = scmp.ne.s32.totalorder %s78, %s79
      %p93 = scmp.eq.s32.totalorder %s24, 7
      %p94 = por %p92, %p93
      %p96 = scmp.ne.s32.totalorder %s79, %s95
      %p97 = scmp.eq.s32.totalorder %s24, 0
      %p98 = por %p96, %p97
      %s99 = ssub.s32 %s27, %s36
      %p100 = scmp.eq.s32.totalorder %s99, 0
      %s102 = sadd.s32 %s101, 1
      %s103 = scalar_select %p100, %s101, %s102
      %p106 = pneg %p100
      %p107 = scmp.eq.s32.totalorder %s18, 7
      %p108 = por %p106, %p107
      %p109 = scmp.ne.s32.totalorder %s101, %s104
      %p110 = scmp.eq.s32.totalorder %s18, 0
      %p111 = por %p109, %p110
      %p112 = scmp.ne.s32.totalorder %s101, %s104
      %p113 = scmp.eq.s32.totalorder %s23, 7
      %p114 = por %p112, %p113
      %p115 = scmp.ne.s32.totalorder %s104, %s105
      %p116 = scmp.eq.s32.totalorder %s23, 0
      %p117 = por %p115, %p116
      %p118 = scmp.ne.s32.totalorder %s104, %s105
      %p119 = scmp.eq.s32.totalorder %s24, 7
      %p120 = por %p118, %p119
      %p122 = scmp.ne.s32.totalorder %s105, %s121
      %p123 = scmp.eq.s32.totalorder %s24, 0
      %p124 = por %p122, %p123
      %s125 = ssub.s32 %s25, %s44
      %s126 = ssub.s32 %s27, %s36
      %s127 = sor.u32 %s125, %s126
      %s128 = ssub.s32 %s26, %s40
      %s129 = sor.u32 %s127, %s128
      %p130 = scmp.eq.s32.totalorder %s129, 0
      %s132 = sadd.s32 %s131, 1
      %s133 = scalar_select %p130, %s131, %s132
      %p136 = pneg %p130
      %p137 = scmp.eq.s32.totalorder %s18, 7
      %p138 = por %p136, %p137
      %p139 = scmp.ne.s32.totalorder %s131, %s134
      %p140 = scmp.eq.s32.totalorder %s18, 0
      %p141 = por %p139, %p140
      %p142 = scmp.ne.s32.totalorder %s131, %s134
      %p143 = scmp.eq.s32.totalorder %s23, 7
      %p144 = por %p142, %p143
      %p145 = scmp.ne.s32.totalorder %s134, %s135
      %p146 = scmp.eq.s32.totalorder %s23, 0
      %p147 = por %p145, %p146
      %p148 = scmp.ne.s32.totalorder %s134, %s135
      %p149 = scmp.eq.s32.totalorder %s24, 7
      %p150 = por %p148, %p149
      %p152 = scmp.ne.s32.totalorder %s135, %s151
      %p153 = scmp.eq.s32.totalorder %s24, 0
      %p154 = por %p152, %p153
      %p155 = scmp.le.s32.totalorder 1, %s18
      %p156 = scmp.lt.s32.totalorder %s18, 9
      %p157 = pnand %p155, %p156
      %p158 = pneg %p157
      // Predicated region
      $region9: #{tpu_custom_call.1} parent=5 // pred_check
        _
      $region10: #{tpu_custom_call.1} parent=5 // pred_check_branch
        %160 = sbr.rel (%p157) target = $region12
      $region11: #{tpu_custom_call.1} parent=5 // pred_region
        %s161 = ssub.s32 %s18, 1
      $region12: #{tpu_custom_call.1} parent=5 // pred_fallthru
        _
      %p162 = scmp.lt.s32.totalorder %s18, 8
      // Predicated region
      $region13: #{tpu_custom_call.1} parent=5 // pred_check
        %p163 = pneg %p162
      $region14: #{tpu_custom_call.1} parent=5 // pred_check_branch
        %165 = sbr.rel (%p163) target = $region16
      $region15: #{tpu_custom_call.1} parent=5 // pred_region
        // Predicated region
        $region17: #{tpu_custom_call.1} parent=15 // pred_check
          %p166 = pneg %p59
        $region18: #{tpu_custom_call.1} parent=15 // pred_check_branch
          %168 = sbr.rel (%p166) target = $region20
        $region19: #{tpu_custom_call.1} parent=15 // pred_region
          %s169 = sand.u32 %s49, 1
          %s170 = scalar_lea.sflag [#allocation3], %s169
          %s171 = sand.u32 %s49, 1
          %s172 = smul.addr %s171, 16
          %s173 = scalar_lea.vmem [#allocation2], %s172
          %s174 = smul.u32 2, %s26
          %s176 = ssub.s32 256, 256
          %177 = vsyncadd %s170, %s176
          %s178 = smul.addr %s25, 2
          %s179 = sadd.s32 %s174, %s178
          %s180 = smul.addr %s179, 128
          %s181 = scalar_lea.hbm %s0, %s180
          %s182 = sshll.u32 %s173, 4
          %s183 = int_to_ptr.vmem [resolvable:$true] %s182
          %188 = dma.hbm_to_vmem [thread:$0]  %s181, 256, %s183, %s170, 128, 128, 8
        $region20: #{tpu_custom_call.1} parent=15 // pred_fallthru
          _
        // Predicated region
        $region21: #{tpu_custom_call.1} parent=15 // pred_check
          %p189 = pneg %p85
        $region22: #{tpu_custom_call.1} parent=15 // pred_check_branch
          %191 = sbr.rel (%p189) target = $region24
        $region23: #{tpu_custom_call.1} parent=15 // pred_region
          %s192 = sand.u32 %s75, 1
          %s193 = scalar_lea.sflag [#allocation6], %s192
          %s194 = sand.u32 %s75, 1
          %s195 = smul.addr %s194, 16
          %s196 = scalar_lea.vmem [#allocation5], %s195
          %s198 = ssub.s32 256, 256
          %199 = vsyncadd %s193, %s198
          %s200 = smul.addr %s27, 2
          %s201 = smul.addr %s200, 128
          %s202 = scalar_lea.hbm %s1, %s201
          %s203 = sshll.u32 %s196, 4
          %s204 = int_to_ptr.vmem [resolvable:$true] %s203
          %209 = dma.hbm_to_vmem [thread:$0]  %s202, 256, %s204, %s193, 128, 128, 8
        $region24: #{tpu_custom_call.1} parent=15 // pred_fallthru
          _
        // Predicated region
        $region25: #{tpu_custom_call.1} parent=15 // pred_check
          %p210 = pneg %p111
        $region26: #{tpu_custom_call.1} parent=15 // pred_check_branch
          %212 = sbr.rel (%p210) target = $region28
        $region27: #{tpu_custom_call.1} parent=15 // pred_region
          %p213 = scmp.lt.s32.totalorder %s27, 3
          %s214 = scalar_select %p213, %s27, 3
          %s215 = scalar_lea.vmem %s2, %s214
        $region28: #{tpu_custom_call.1} parent=15 // pred_fallthru
          _
      $region16: #{tpu_custom_call.1} parent=5 // pred_fallthru
        _
      %p216 = scmp.le.s32.totalorder 1, %s18
      %p217 = scmp.lt.s32.totalorder %s18, 9
      %p218 = pnand %p216, %p217
      %p219 = pneg %p218
      // Predicated region
      $region29: #{tpu_custom_call.1} parent=5 // pred_check
        _
      $region30: #{tpu_custom_call.1} parent=5 // pred_check_branch
        %221 = sbr.rel (%p218) target = $region32
      $region31: #{tpu_custom_call.1} parent=5 // pred_region
        %s222 = ssub.s32 %s18, 1
        %s223 = sand.u32 %s52, 1
        %s224 = scalar_lea.sflag [#allocation3], %s223
        %s225 = sand.u32 %s52, 1
        %s226 = smul.addr %s225, 16
        %s227 = scalar_lea.vmem [#allocation2], %s226
        // Predicated region
        $region33: #{tpu_custom_call.1} parent=31 // pred_check
          %p228 = pneg %p65
        $region34: #{tpu_custom_call.1} parent=31 // pred_check_branch
          %230 = sbr.rel (%p228) target = $region36
        $region35: #{tpu_custom_call.1} parent=31 // pred_region
          %231 = dma.done %s224, 256
        $region36: #{tpu_custom_call.1} parent=31 // pred_fallthru
          _
        %s232 = sand.u32 %s78, 1
        %s233 = scalar_lea.sflag [#allocation6], %s232
        %s234 = sand.u32 %s78, 1
        %s235 = smul.addr %s234, 16
        %s236 = scalar_lea.vmem [#allocation5], %s235
        // Predicated region
        $region37: #{tpu_custom_call.1} parent=31 // pred_check
          %p237 = pneg %p91
        $region38: #{tpu_custom_call.1} parent=31 // pred_check_branch
          %239 = sbr.rel (%p237) target = $region40
        $region39: #{tpu_custom_call.1} parent=31 // pred_region
          %240 = dma.done %s233, 256
        $region40: #{tpu_custom_call.1} parent=31 // pred_fallthru
          _
        %s241 = sand.u32 %s52, 1
        %s242 = scalar_lea.sflag [#allocation3], %s241
        %s243 = sand.u32 %s52, 1
        %s244 = smul.addr %s243, 16
        %s245 = scalar_lea.vmem [#allocation2], %s244
        %p246 = pneg %p65
        %p247 = pneg %p62
        %s248 = sand.u32 %s78, 1
        %s249 = scalar_lea.sflag [#allocation6], %s248
        %s250 = sand.u32 %s78, 1
        %s251 = smul.addr %s250, 16
        %s252 = scalar_lea.vmem [#allocation5], %s251
        %p253 = pneg %p91
        %p254 = pneg %p88
        %p255 = scmp.lt.s32.totalorder %s30, 3
        %s256 = scalar_select %p255, %s30, 3
        %s257 = scalar_lea.vmem %s2, %s256
        %p258 = pneg %p117
        %p259 = pneg %p114
        %p260 = pneg %p147
        %p261 = pneg %p144
        %s262 = sand.u32 %s134, 1
        %s263 = scalar_lea.sflag [#allocation4], %s262
        %s264 = sand.u32 %s134, 1
        %s265 = smul.addr %s264, 16
        %s266 = scalar_lea.vmem [#allocation7], %s265
        %s267 = smul.u32 2, %s29
        %p268 = scmp.lt.s32.totalorder %s30, 3
        %s269 = scalar_select %p268, %s30, 3
        %s270 = scalar_lea.vmem %s2, %s269
        %s271 = smul.u32 2, %s29
        %v272 = vld [vmem:[%s227] sm:$0xff]
        %v273 = vld [vmem:[%s227 + $0x8] sm:$0xff]
        %v274 = vld [vmem:[%s236] sm:$0xff]
        %v275 = vld [vmem:[%s236 + $0x8] sm:$0xff]
        %v276 = vld [vmem:[%s270] sm:$0x1]
        %v278 = vlaneseq
        %v279 = vshrl.u32 %v278, 7
        %v280 = vsub.s32 0, %v279
        %v281 = vrot.slane %v276, %v280
        %vm283 = vcmask 130048
        %v285 = vsel %vm283, %v272, 0
        %v288 = vsel %vm283, %v273, 0
        %290 = vmatprep.subr.mxu0 0.0
        %291 = vmatpush1.msra.mxu0 %v274
        %292 = vmatprep.subr.mxu0 0.0
        %293 = vmatpush1.msra.mxu0 %v275
        %294 = vmatprep.subr.mxu0 0.0
        %295 = vmatpush1.msra.mxu0 0.0
        %296 = vmatprep.subr.mxu0 0.0
        %297 = vmatpush1.msra.mxu0 0.0
        %298 = vmatprep.subr.mxu0 0.0
        %299 = vmatpush1.msra.mxu0 0.0
        %300 = vmatprep.subr.mxu0 0.0
        %301 = vmatpush1.msra.mxu0 0.0
        %302 = vmatprep.subr.mxu0 0.0
        %303 = vmatpush1.msra.mxu0 0.0
        %304 = vmatprep.subr.mxu0 0.0
        %305 = vmatpush1.msra.mxu0 0.0
        %306 = vmatprep.subr.mxu0 0.0
        %307 = vmatpush1.msra.mxu0 0.0
        %308 = vmatprep.subr.mxu0 0.0
        %309 = vmatpush1.msra.mxu0 0.0
        %310 = vmatprep.subr.mxu0 0.0
        %311 = vmatpush1.msra.mxu0 0.0
        %312 = vmatprep.subr.mxu0 0.0
        %313 = vmatpush1.msra.mxu0 0.0
        %314 = vmatprep.subr.mxu0 0.0
        %315 = vmatpush1.msra.mxu0 0.0
        %316 = vmatprep.subr.mxu0 0.0
        %317 = vmatpush1.msra.mxu0 0.0
        %318 = vmatprep.subr.mxu0 0.0
        %319 = vmatpush1.msra.mxu0 0.0
        %320 = vmatprep.subr.mxu0 0.0
        %321 = vmatpush1.msra.mxu0 0.0
        %322 = vmatprep.subr.mxu0 0.0
        %323 = vmatpush1.msra.mxu0 0.0
        %324 = vmatprep.subr.mxu0 0.0
        %325 = vmatpush1.msra.mxu0 0.0
        %326 = vmatprep.subr.mxu0 0.0
        %327 = vmatpush1.msra.mxu0 0.0
        %328 = vmatprep.subr.mxu0 0.0
        %329 = vmatpush1.msra.mxu0 0.0
        %330 = vmatprep.subr.mxu0 0.0
        %331 = vmatpush1.msra.mxu0 0.0
        %332 = vmatprep.subr.mxu0 0.0
        %333 = vmatpush1.msra.mxu0 0.0
        %334 = vmatprep.subr.mxu0 0.0
        %335 = vmatpush1.msra.mxu0 0.0
        %336 = vmatprep.subr.mxu0 0.0
        %337 = vmatpush1.msra.mxu0 0.0
        %338 = vmatprep.subr.mxu0 0.0
        %339 = vmatpush1.msra.mxu0 0.0
        %340 = vmatprep.subr.mxu0 0.0
        %341 = vmatpush1.msra.mxu0 0.0
        %342 = vmatprep.subr.mxu0 0.0
        %343 = vmatpush1.msra.mxu0 0.0
        %344 = vmatprep.subr.mxu0 0.0
        %345 = vmatpush1.msra.mxu0 0.0
        %346 = vmatprep.subr.mxu0 0.0
        %347 = vmatpush1.msra.mxu0 0.0
        %348 = vmatprep.subr.mxu0 0.0
        %349 = vmatpush1.msra.mxu0 0.0
        %350 = vmatprep.subr.mxu0 0.0
        %351 = vmatpush1.msra.mxu0 0.0
        %352 = vmatprep.subr.mxu0 0.0
        %353 = vmatpush1.msra.mxu0 0.0
        %354 = vmatprep.mubr.f32.mxu0 0.0
        %355 = vmatmul.mubr.f32.gmra.mrb[0].mxu0 %v285
        %v356 = vpop.f32.mrb[0].mxu0
        %v357 = vadd.f32 %v281, %v356
        %v358 = vpop.f32.mrb[0].mxu0
        %359 = vmatprep.mubr.f32.mxu0 0.0
        %360 = vmatmul.mubr.f32.gmra.mrb[0].mxu0 %v288
        %v361 = vpop.f32.mrb[0].mxu0
        %v362 = vadd.f32 %v281, %v361
        %v363 = vpop.f32.mrb[0].mxu0
        %364 = vdwg.mxu0
        %vm365 = vcmask 261120
        %366 = vst.msk [vmem:[%s266] sm:$0xff] %vm365, %v357
        %367 = vst.msk [vmem:[%s266 + $0x8] sm:$0xff] %vm365, %v362
        %s368 = sand.u32 %s134, 1
        %s369 = scalar_lea.sflag [#allocation4], %s368
        %s370 = sand.u32 %s134, 1
        %s371 = smul.addr %s370, 16
        %s372 = scalar_lea.vmem [#allocation7], %s371
        // Predicated region
        $region41: #{tpu_custom_call.1} parent=31 // pred_check
          %p373 = pneg %p144
        $region42: #{tpu_custom_call.1} parent=31 // pred_check_branch
          %375 = sbr.rel (%p373) target = $region44
        $region43: #{tpu_custom_call.1} parent=31 // pred_region
          %s376 = smul.u32 2, %s29
          %s378 = ssub.s32 256, 256
          %379 = vsyncadd %s369, %s378
          %s380 = smul.addr %s30, 2
          %s381 = sadd.s32 %s376, %s380
          %s382 = smul.addr %s28, 8
          %s383 = sadd.s32 %s381, %s382
          %s384 = smul.addr %s383, 128
          %s385 = scalar_lea.hbm %s3, %s384
          %s386 = sshll.u32 %s372, 4
          %s387 = int_to_ptr.vmem [resolvable:$true] %s386
          %392 = dma.vmem_to_hbm [thread:$0]  %s387, 256, %s385, %s369, 128, 128, 8
        $region44: #{tpu_custom_call.1} parent=31 // pred_fallthru
          _
      $region32: #{tpu_custom_call.1} parent=5 // pred_fallthru
        _
      %p393 = scmp.le.s32.totalorder 2, %s18
      // Predicated region
      $region45: #{tpu_custom_call.1} parent=5 // pred_check
        %p394 = pneg %p393
      $region46: #{tpu_custom_call.1} parent=5 // pred_check_branch
        %396 = sbr.rel (%p394) target = $region48
      $region47: #{tpu_custom_call.1} parent=5 // pred_region
        %s397 = ssub.s32 %s18, 2
        // Predicated region
        $region49: #{tpu_custom_call.1} parent=47 // pred_check
          %p398 = pneg %p150
        $region50: #{tpu_custom_call.1} parent=47 // pred_check_branch
          %400 = sbr.rel (%p398) target = $region52
        $region51: #{tpu_custom_call.1} parent=47 // pred_region
          %s401 = sand.u32 %s135, 1
          %s402 = scalar_lea.sflag [#allocation4], %s401
          %s403 = sand.u32 %s135, 1
          %s404 = smul.addr %s403, 16
          %s405 = scalar_lea.vmem [#allocation7], %s404
          %406 = dma.done %s402, 256
        $region52: #{tpu_custom_call.1} parent=47 // pred_fallthru
          _
      $region48: #{tpu_custom_call.1} parent=5 // pred_fallthru
        _
    $region6: #{tpu_custom_call.1} parent=1 // loop_footer
      %s22 = sadd.s32 1, %s18
    $region7: #{tpu_custom_call.1} parent=1 // loop_footer_branch
      %17 = sbr.rel target = $region3
    $region8: #{tpu_custom_call.1} parent=1 // loop_exit
      _
    %407 = vsyncpa [#allocation3], 1
    %s408 = scalar_lea.sflag [#allocation3], 1
    %409 = vsyncpa %s408, 1
    %410 = vsyncpa [#allocation6], 1
    %s411 = scalar_lea.sflag [#allocation6], 1
    %412 = vsyncpa %s411, 1
    %413 = vsyncpa [#allocation4], 1
    %s414 = scalar_lea.sflag [#allocation4], 1
    %415 = vsyncpa %s414, 1

</llo_original>
